<compile_context>
chip_gen: v6e
topology: v6e:2x2x1
jax: 0.10.0
libtpu: 0.0.40
codegen_flags: <defaults>
</compile_context>

<pallas_src>
import functools

import jax
import jax.numpy as jnp
from jax.experimental import pallas as pl
from jax.experimental.pallas import tpu as pltpu


HIDDEN = 50          # matches the PyTorch module
COL_PAD = 128        # lane width: hidden / output lanes are padded to this
NEG_BIG = -1e30      # "minus infinity" for padded softmax lanes
MIN_BLOCK_B = 8
MAX_BLOCK_B = 4096


def _round_up(x, m):
    return ((x + m - 1) // m) * m


def _select_block_b(batch):
    """Bucketed (power-of-two) batch-tile size: few grid steps, few recompiles.

    For batch >= 128 the tile is capped at ~half the (8-rounded) batch so the
    "parallel" grid axis has >= 2 tiles and both v7x TensorCores are used.
    """
    b8 = _round_up(max(int(batch), 1), 8)
    if b8 <= 128:
        blk = int(pl.next_power_of_2(b8))          # single tile
    else:
        half = (b8 + 1) // 2
        blk = 1 << (half.bit_length() - 1)         # largest pow2 <= ceil(B/2)
    return int(min(max(blk, MIN_BLOCK_B), MAX_BLOCK_B))


# --------------------------------------------------------------------------
# Kernel: fused 4-layer MLP (+tanh) and optional softmax on one batch tile.
# Parameters arrive as a single packed, lane-padded slab:
#   rows [0, state_dim)              : W1  (state_dim x 128, cols>=50 zero)
#   rows [r1, r1+128)                : W2  (rows>=50 zero, cols>=50 zero)
#   rows [r1+128, r1+256)            : W3
#   rows [r1+256, r1+384)            : W4  (cols>=action_dim zero)
#   rows [r1+384, r1+392)            : b1..b4 (one row each) + zero padding
# where r1 = round_up(state_dim, 8).  For the discrete head, b4's padded
# lanes are -1e30 so exp() zeroes them out of the softmax.
# --------------------------------------------------------------------------
def _policy_mlp_kernel(x_ref, slab_ref, out_ref, *,
                       state_dim, action_dim, r1, apply_softmax):
    x = x_ref[...]                                   # [bb, state_dim] f32

    o_w2 = r1
    o_w3 = r1 + COL_PAD
    o_w4 = r1 + 2 * COL_PAD
    o_b = r1 + 3 * COL_PAD

    w1 = slab_ref[0:state_dim, :]                    # [state_dim, 128]
    w2 = slab_ref[o_w2:o_w2 + COL_PAD, :]            # [128, 128]
    w3 = slab_ref[o_w3:o_w3 + COL_PAD, :]            # [128, 128]
    w4 = slab_ref[o_w4:o_w4 + COL_PAD, :]            # [128, 128]
    bias = slab_ref[o_b:o_b + 8, :]                  # [8, 128] aligned load
    b1 = bias[0:1, :]
    b2 = bias[1:2, :]
    b3 = bias[2:3, :]
    b4 = bias[3:4, :]

    # Padded lanes stay exactly 0 through the hidden layers (zero weight
    # columns + zero bias -> tanh(0) = 0), so the padded contractions are
    # bit-identical to the unpadded ones.
    h = jnp.tanh(jnp.dot(x, w1, preferred_element_type=jnp.float32) + b1)
    h = jnp.tanh(jnp.dot(h, w2, preferred_element_type=jnp.float32) + b2)
    h = jnp.tanh(jnp.dot(h, w3, preferred_element_type=jnp.float32) + b3)
    y = jnp.dot(h, w4, preferred_element_type=jnp.float32) + b4   # [bb, 128]

    if apply_softmax:
        m = jnp.max(y, axis=-1, keepdims=True)
        e = jnp.exp(y - m)       # padded lanes carry -1e30 bias -> exp == 0
        y = e / jnp.sum(e, axis=-1, keepdims=True)   # exact div (1e-5 tol)

    # Slim, true-width store: only action_dim lanes go back to HBM.
    out_ref[...] = y[:, :action_dim].astype(out_ref.dtype)


def policy_forward_pallas(states, slab, *, action_dim, apply_softmax, block_b):
    """states: [B, state_dim] f32 (B a multiple of 8); slab: packed params."""
    b_total, state_dim = states.shape
    r1 = _round_up(state_dim, 8)
    grid = (pl.cdiv(b_total, block_b),)

    kernel = functools.partial(_policy_mlp_kernel,
                               state_dim=state_dim,
                               action_dim=action_dim,
                               r1=r1,
                               apply_softmax=apply_softmax)

    return pl.pallas_call(
        kernel,
        out_shape=jax.ShapeDtypeStruct((b_total, action_dim), jnp.float32),
        grid_spec=pltpu.PrefetchScalarGridSpec(
            num_scalar_prefetch=0,
            grid=grid,
            in_specs=[
                pl.BlockSpec((block_b, state_dim), lambda i: (i, 0)),  # states
                pl.BlockSpec(slab.shape, lambda i: (0, 0)),            # params
            ],
            out_specs=pl.BlockSpec((block_b, action_dim), lambda i: (i, 0)),
        ),
        compiler_params=pltpu.CompilerParams(
            dimension_semantics=("parallel",)),
    )(states, slab)


@functools.partial(jax.jit,
                   static_argnames=("action_dim", "apply_softmax", "block_b"))
def _policy_apply(states, slab, *, action_dim, apply_softmax, block_b):
    """Pad batch to a multiple of 8 (only if needed), run the fused kernel."""
    B = states.shape[0]
    b_pad = _round_up(B, 8)
    if b_pad != B:
        # At most 7 extra rows; partial final grid blocks are handled by
        # Pallas, so we never pad up to block_b.
        states = jnp.pad(states, ((0, b_pad - B), (0, 0)))
    out = policy_forward_pallas(states, slab,
                                action_dim=action_dim,
                                apply_softmax=apply_softmax,
                                block_b=block_b)
    return out[:B] if b_pad != B else out


class PolicyNetwork:
    """JAX/Pallas port of the PyTorch PolicyNetwork module.

    __call__ returns the distribution *parameters*:
      discrete:   {"probs": [B, action_dim]}               (Categorical probs)
      continuous: {"mean": [B, action_dim], "cov": [A, A]} (MVN params)
    """

    def __init__(self, state_dim, action_dim, discrete, key):
        assert action_dim <= COL_PAD and HIDDEN <= COL_PAD
        self.state_dim = state_dim
        self.action_dim = action_dim
        self.discrete = discrete

        keys = jax.random.split(key, 8)

        def linear_init(kw, kb, fan_in, fan_out):
            # PyTorch nn.Linear default: U(-1/sqrt(fan_in), +1/sqrt(fan_in)).
            bound = float(1.0 / (fan_in ** 0.5))
            w = jax.random.uniform(kw, (fan_in, fan_out), jnp.float32,
                                   minval=-bound, maxval=bound)
            b = jax.random.uniform(kb, (fan_out,), jnp.float32,
                                   minval=-bound, maxval=bound)
            return w, b

        w1, b1 = linear_init(keys[0], keys[1], state_dim, HIDDEN)
        w2, b2 = linear_init(keys[2], keys[3], HIDDEN, HIDDEN)
        w3, b3 = linear_init(keys[4], keys[5], HIDDEN, HIDDEN)
        w4, b4 = linear_init(keys[6], keys[7], HIDDEN, action_dim)
        self._raw_params = ((w1, b1), (w2, b2), (w3, b3), (w4, b4))

        # ---- Pack everything into one (8,128)-aligned f32 slab. ----
        r1 = _round_up(state_dim, 8)
        rows = r1 + 3 * COL_PAD + 8
        slab = jnp.zeros((rows, COL_PAD), jnp.float32)
        slab = slab.at[:state_dim, :HIDDEN].set(w1)
        slab = slab.at[r1:r1 + HIDDEN, :HIDDEN].set(w2)
        slab = slab.at[r1 + COL_PAD:r1 + COL_PAD + HIDDEN, :HIDDEN].set(w3)
        slab = slab.at[r1 + 2 * COL_PAD:
                       r1 + 2 * COL_PAD + HIDDEN, :action_dim].set(w4)
        ob = r1 + 3 * COL_PAD
        slab = slab.at[ob + 0, :HIDDEN].set(b1)
        slab = slab.at[ob + 1, :HIDDEN].set(b2)
        slab = slab.at[ob + 2, :HIDDEN].set(b3)
        if discrete:
            # Padded logit lanes become ~ -inf so exp() zeroes them out of the
            # softmax; no masking needed inside the kernel.
            slab = slab.at[ob + 3, :].set(
                jnp.full((COL_PAD,), NEG_BIG, jnp.float32))
        slab = slab.at[ob + 3, :action_dim].set(b4)
        self.slab = slab

        if not discrete:
            # nn.Parameter(torch.zeros(action_dim))
            self.log_std = jnp.zeros((action_dim,), jnp.float32)
        else:
            self.log_std = None

    def __call__(self, states, *, block_b=None):
        states = jnp.asarray(states, jnp.float32)
        if block_b is None:
            block_b = _select_block_b(states.shape[0])

        if self.discrete:
            probs = _policy_apply(states, self.slab,
                                  action_dim=self.action_dim,
                                  apply_softmax=True, block_b=block_b)
            # TODO(synk): Categorical distribution object / sampling has no
            # Pallas equivalent; we return its parameters (probs).
            return {"probs": probs}
        else:
            mean = _policy_apply(states, self.slab,
                                 action_dim=self.action_dim,
                                 apply_softmax=False, block_b=block_b)
            std = jnp.exp(self.log_std)
            cov = jnp.diag(std ** 2)  # diag_embed of a 1-D std vector
            # TODO(synk): MultivariateNormal distribution object / sampling
            # has no Pallas equivalent; we return its parameters (mean, cov).
            return {"mean": mean, "cov": cov}

    # ----- pure-JAX references for correctness checking ------------------
    def _net_ref(self, states):
        (w1, b1), (w2, b2), (w3, b3), (w4, b4) = self._raw_params
        h = jnp.tanh(states @ w1 + b1)
        h = jnp.tanh(h @ w2 + b2)
        h = jnp.tanh(h @ w3 + b3)
        return h @ w4 + b4

    def reference_mean(self, states):
        return self._net_ref(states.astype(jnp.float32))

    def reference_probs(self, states):
        return jax.nn.softmax(self._net_ref(states.astype(jnp.float32)), -1)


if __name__ == "__main__":
    key = jax.random.PRNGKey(0)
    k_pc, k_pd, k_sc, k_sd, k_sl = jax.random.split(key, 5)

    state_dim, action_dim, batch = 16, 4, 32

    # --- Continuous-action policy: MVN(mean, diag(exp(log_std)^2)) ---
    pol_c = PolicyNetwork(state_dim, action_dim, discrete=False, key=k_pc)
    states_c = jax.random.normal(k_sc, (batch, state_dim), jnp.float32)
    out_c = pol_c(states_c)
    mean = jax.block_until_ready(out_c["mean"])
    ref_mean = pol_c.reference_mean(states_c)
    assert mean.shape == (batch, action_dim)
    assert jnp.allclose(mean, ref_mean, atol=1e-5, rtol=1e-5)
    # log_std initialized to zeros -> cov = identity
    assert jnp.allclose(out_c["cov"], jnp.eye(action_dim), atol=1e-6)

    # --- Discrete-action policy: Categorical(softmax(logits)) ---
    pol_d = PolicyNetwork(state_dim, action_dim, discrete=True, key=k_pd)
    states_d = jax.random.normal(k_sd, (batch, state_dim), jnp.float32)
    out_d = pol_d(states_d)
    probs = jax.block_until_ready(out_d["probs"])
    ref_probs = pol_d.reference_probs(states_d)
    assert probs.shape == (batch, action_dim)
    assert jnp.allclose(probs, ref_probs, atol=1e-5, rtol=1e-5)
    assert jnp.allclose(probs.sum(-1), 1.0, atol=1e-5)

    # --- Larger, non-multiple-of-8 batch: multi-tile grid + partial block ---
    states_l = jax.random.normal(k_sl, (203, state_dim), jnp.float32)
    mean_l = jax.block_until_ready(pol_c(states_l)["mean"])
    ref_l = pol_c.reference_mean(states_l)
    assert mean_l.shape == (203, action_dim)
    assert jnp.allclose(mean_l, ref_l, atol=1e-5, rtol=1e-5)

    print("KERNEL_OK")
</pallas_src>

<mosaic_0001>
module attributes {stable_mosaic.version = 11 : i64} {
  func.func @_policy_mlp_kernel(%arg0: i32, %arg1: memref<32x16xf32, #tpu.memory_space<vmem>>, %arg2: memref<408x128xf32, #tpu.memory_space<vmem>>, %arg3: memref<32x4xf32, #tpu.memory_space<vmem>>) attributes {dimension_semantics = [#tpu.dimension_semantics<parallel>], iteration_bounds = array<i64: 1>, scalar_prefetch = 0 : i64, scratch_operands = 0 : i64, tpu.core_type = #tpu.core_type<tc>, window_params = [{transform_indices = @transform_0, window_bounds = array<i64: 32, 16>}, {pipeline_mode = #tpu.pipeline_mode<synchronous>, transform_indices = @transform_1, window_bounds = array<i64: 408, 128>}, {transform_indices = @transform_2, window_bounds = array<i64: 32, 4>}]} {
    %c0 = arith.constant 0 : index
    %c0_0 = arith.constant 0 : index
    %0 = vector.load %arg1[%c0, %c0_0] : memref<32x16xf32, #tpu.memory_space<vmem>>, vector<32x16xf32>
    %c0_1 = arith.constant 0 : index
    %c0_2 = arith.constant 0 : index
    %1 = vector.load %arg2[%c0_1, %c0_2] : memref<408x128xf32, #tpu.memory_space<vmem>>, vector<16x128xf32>
    %c16 = arith.constant 16 : index
    %c0_3 = arith.constant 0 : index
    %2 = vector.load %arg2[%c16, %c0_3] : memref<408x128xf32, #tpu.memory_space<vmem>>, vector<128x128xf32>
    %c144 = arith.constant 144 : index
    %c0_4 = arith.constant 0 : index
    %3 = vector.load %arg2[%c144, %c0_4] : memref<408x128xf32, #tpu.memory_space<vmem>>, vector<128x128xf32>
    %c272 = arith.constant 272 : index
    %c0_5 = arith.constant 0 : index
    %4 = vector.load %arg2[%c272, %c0_5] : memref<408x128xf32, #tpu.memory_space<vmem>>, vector<128x128xf32>
    %c400 = arith.constant 400 : index
    %c0_6 = arith.constant 0 : index
    %5 = vector.load %arg2[%c400, %c0_6] : memref<408x128xf32, #tpu.memory_space<vmem>>, vector<8x128xf32>
    %6 = vector.extract_strided_slice %5 {offsets = [0, 0], sizes = [1, 128], strides = [1, 1]} : vector<8x128xf32> to vector<1x128xf32>
    %7 = vector.extract_strided_slice %5 {offsets = [1, 0], sizes = [1, 128], strides = [1, 1]} : vector<8x128xf32> to vector<1x128xf32>
    %8 = vector.extract_strided_slice %5 {offsets = [2, 0], sizes = [1, 128], strides = [1, 1]} : vector<8x128xf32> to vector<1x128xf32>
    %9 = vector.extract_strided_slice %5 {offsets = [3, 0], sizes = [1, 128], strides = [1, 1]} : vector<8x128xf32> to vector<1x128xf32>
    %cst = arith.constant dense<0.000000e+00> : vector<32x128xf32>
    %10 = tpu.matmul %0, %1, %cst {dimension_numbers = #tpu.dot_dimension_numbers<[1], [0], [0], [1], [0, 0, 1, 1], [], []>} : vector<32x16xf32>, vector<16x128xf32>, vector<32x128xf32> -> vector<32x128xf32>
    %11 = vector.broadcast %6 : vector<1x128xf32> to vector<32x128xf32>
    %12 = arith.addf %10, %11 : vector<32x128xf32>
    %13 = math.tanh %12 : vector<32x128xf32>
    %cst_7 = arith.constant dense<0.000000e+00> : vector<32x128xf32>
    %14 = tpu.matmul %13, %2, %cst_7 {dimension_numbers = #tpu.dot_dimension_numbers<[1], [0], [0], [1], [0, 0, 1, 1], [], []>} : vector<32x128xf32>, vector<128x128xf32>, vector<32x128xf32> -> vector<32x128xf32>
    %15 = vector.broadcast %7 : vector<1x128xf32> to vector<32x128xf32>
    %16 = arith.addf %14, %15 : vector<32x128xf32>
    %17 = math.tanh %16 : vector<32x128xf32>
    %cst_8 = arith.constant dense<0.000000e+00> : vector<32x128xf32>
    %18 = tpu.matmul %17, %3, %cst_8 {dimension_numbers = #tpu.dot_dimension_numbers<[1], [0], [0], [1], [0, 0, 1, 1], [], []>} : vector<32x128xf32>, vector<128x128xf32>, vector<32x128xf32> -> vector<32x128xf32>
    %19 = vector.broadcast %8 : vector<1x128xf32> to vector<32x128xf32>
    %20 = arith.addf %18, %19 : vector<32x128xf32>
    %21 = math.tanh %20 : vector<32x128xf32>
    %cst_9 = arith.constant dense<0.000000e+00> : vector<32x128xf32>
    %22 = tpu.matmul %21, %4, %cst_9 {dimension_numbers = #tpu.dot_dimension_numbers<[1], [0], [0], [1], [0, 0, 1, 1], [], []>} : vector<32x128xf32>, vector<128x128xf32>, vector<32x128xf32> -> vector<32x128xf32>
    %23 = vector.broadcast %9 : vector<1x128xf32> to vector<32x128xf32>
    %24 = arith.addf %22, %23 : vector<32x128xf32>
    %25 = vector.extract_strided_slice %24 {offsets = [0, 0], sizes = [32, 4], strides = [1, 1]} : vector<32x128xf32> to vector<32x4xf32>
    %c0_10 = arith.constant 0 : index
    %c0_11 = arith.constant 0 : index
    %26 = vector.load %arg3[%c0_10, %c0_11] : memref<32x4xf32, #tpu.memory_space<vmem>>, vector<32x4xf32>
    tpu.vector_store %arg3[%c0_10, %c0_11], %25 {strides = array<i32>} : memref<32x4xf32, #tpu.memory_space<vmem>>, vector<32x4xf32>,
    return
  }
  func.func @transform_0(%arg0: i32) -> (i32, i32) {
    %c0_i32 = arith.constant 0 : i32
    %c0_i32_0 = arith.constant 0 : i32
    return %arg0, %c0_i32 : i32, i32
  }
  func.func @transform_1(%arg0: i32) -> (i32, i32) {
    %c0_i32 = arith.constant 0 : i32
    %c0_i32_0 = arith.constant 0 : i32
    %c0_i32_1 = arith.constant 0 : i32
    return %c0_i32, %c0_i32_0 : i32, i32
  }
  func.func @transform_2(%arg0: i32) -> (i32, i32) {
    %c0_i32 = arith.constant 0 : i32
    %c0_i32_0 = arith.constant 0 : i32
    return %arg0, %c0_i32 : i32, i32
  }
}

</mosaic_0001>

<llo_original>
// kernel: _policy_apply.1
$region0: #{_policy_apply.1}
  #allocation0 [shape = 'u32[]', space=smem, size = 0x4, offset = 0x4, fixed_abs, tag = 'smem constant byte address 0x4 - core index']
  #allocation1 [shape = 'u32[144,128]{1,0:T(1,128)}', space=vmem, size = 0x12000, scoped, tag = 'internal scratch']
  %s0 = inlined_call_operand.vmem [shape: f32[32,16], index: 0, kind: input, shape index: {}]
  %s1 = inlined_call_operand.hbm [shape: f32[408,128], index: 1, kind: input, shape index: {}]
  %s2 = inlined_call_operand.vmem [shape: f32[32,4], index: 2, kind: output, shape index: {}]
  %s3 = sld [smem:[#allocation0]]
  $region22: #{_policy_apply.1} parent=0
    _
  %s5 = ssub.s32 1, %s3
  %s6 = scalar_select 0, %s5, %s3
  $region1: #{_policy_apply.1} parent=0
    #allocation2 [shape = 'u8[208896]{0}', space=vmem, size = 0x33000, scoped, tag = 'input window, operand 1, single buffered']
    #allocation3 [shape = 's32[1]{0}', space=sflag, size = 0x4, scoped, tag = 'scoped memory for _policy_apply.1']
    %7 = vsyncpa [#allocation3], 0
    // Predicated region
    $region2: #{_policy_apply.1} parent=1 // pred_check
      _
    $region3: #{_policy_apply.1} parent=1 // pred_check_branch
      %9 = sbr.rel (0) target = $region5
    $region4: #{_policy_apply.1} parent=1 // pred_region
      _
    $region5: #{_policy_apply.1} parent=1 // pred_fallthru
      _
    // Predicated region
    $region6: #{_policy_apply.1} parent=1 // pred_check
      _
    $region7: #{_policy_apply.1} parent=1 // pred_check_branch
      %11 = sbr.rel (0) target = $region9
    $region8: #{_policy_apply.1} parent=1 // pred_region
      %s13 = ssub.s32 6528, 6528
      %14 = vsyncadd [#allocation3], %s13
      %s15 = sshll.u32 [#allocation2], 4
      %s16 = int_to_ptr.vmem [resolvable:$true] %s15
      %21 = dma.hbm_to_vmem [thread:$0]  %s1, 6528, %s16, [#allocation3], 128, 128, 8
    $region9: #{_policy_apply.1} parent=1 // pred_fallthru
      _
    // Predicated region
    $region10: #{_policy_apply.1} parent=1 // pred_check
      _
    $region11: #{_policy_apply.1} parent=1 // pred_check_branch
      %23 = sbr.rel (0) target = $region13
    $region12: #{_policy_apply.1} parent=1 // pred_region
      %24 = dma.done [#allocation3], 6528
    $region13: #{_policy_apply.1} parent=1 // pred_fallthru
      _
    %v25 = vld [vmem:[%s0] sm:$0xff]
    %v26 = vld [vmem:[%s0 + $0x8] sm:$0xff]
    %v27 = vld [vmem:[%s0 + $0x10] sm:$0xff]
    %v28 = vld [vmem:[%s0 + $0x18] sm:$0xff]
    %v29 = vld [vmem:[#allocation2] sm:$0xff]
    %v30 = vld [vmem:[#allocation2 + $0x8] sm:$0xff]
    %v31 = vld [vmem:[#allocation2 + $0x10] sm:$0xff]
    %v32 = vld [vmem:[#allocation2 + $0x18] sm:$0xff]
    %v33 = vld [vmem:[#allocation2 + $0x20] sm:$0xff]
    %v34 = vld [vmem:[#allocation2 + $0x28] sm:$0xff]
    %v35 = vld [vmem:[#allocation2 + $0x30] sm:$0xff]
    %v36 = vld [vmem:[#allocation2 + $0x38] sm:$0xff]
    %v37 = vld [vmem:[#allocation2 + $0x40] sm:$0xff]
    %v38 = vld [vmem:[#allocation2 + $0x48] sm:$0xff]
    %v39 = vld [vmem:[#allocation2 + $0x50] sm:$0xff]
    %v40 = vld [vmem:[#allocation2 + $0x58] sm:$0xff]
    %v41 = vld [vmem:[#allocation2 + $0x60] sm:$0xff]
    %v42 = vld [vmem:[#allocation2 + $0x68] sm:$0xff]
    %v43 = vld [vmem:[#allocation2 + $0x70] sm:$0xff]
    %v44 = vld [vmem:[#allocation2 + $0x78] sm:$0xff]
    %v45 = vld [vmem:[#allocation2 + $0x80] sm:$0xff]
    %v46 = vld [vmem:[#allocation2 + $0x88] sm:$0xff]
    %v47 = vld [vmem:[#allocation2 + $0x90] sm:$0xff]
    %v48 = vld [vmem:[#allocation2 + $0x98] sm:$0xff]
    %v49 = vld [vmem:[#allocation2 + $0xa0] sm:$0xff]
    %v50 = vld [vmem:[#allocation2 + $0xa8] sm:$0xff]
    %v51 = vld [vmem:[#allocation2 + $0xb0] sm:$0xff]
    %v52 = vld [vmem:[#allocation2 + $0xb8] sm:$0xff]
    %v53 = vld [vmem:[#allocation2 + $0xc0] sm:$0xff]
    %v54 = vld [vmem:[#allocation2 + $0xc8] sm:$0xff]
    %v55 = vld [vmem:[#allocation2 + $0xd0] sm:$0xff]
    %v56 = vld [vmem:[#allocation2 + $0xd8] sm:$0xff]
    %v57 = vld [vmem:[#allocation2 + $0xe0] sm:$0xff]
    %v58 = vld [vmem:[#allocation2 + $0xe8] sm:$0xff]
    %v59 = vld [vmem:[#allocation2 + $0xf0] sm:$0xff]
    %v60 = vld [vmem:[#allocation2 + $0xf8] sm:$0xff]
    %v61 = vld [vmem:[#allocation2 + $0x100] sm:$0xff]
    %v62 = vld [vmem:[#allocation2 + $0x108] sm:$0xff]
    %v63 = vld [vmem:[#allocation2 + $0x110] sm:$0xff]
    %v64 = vld [vmem:[#allocation2 + $0x118] sm:$0xff]
    %v65 = vld [vmem:[#allocation2 + $0x120] sm:$0xff]
    %v66 = vld [vmem:[#allocation2 + $0x128] sm:$0xff]
    %v67 = vld [vmem:[#allocation2 + $0x130] sm:$0xff]
    %v68 = vld [vmem:[#allocation2 + $0x138] sm:$0xff]
    %v69 = vld [vmem:[#allocation2 + $0x140] sm:$0xff]
    %v70 = vld [vmem:[#allocation2 + $0x148] sm:$0xff]
    %v71 = vld [vmem:[#allocation2 + $0x150] sm:$0xff]
    %v72 = vld [vmem:[#allocation2 + $0x158] sm:$0xff]
    %v73 = vld [vmem:[#allocation2 + $0x160] sm:$0xff]
    %v74 = vld [vmem:[#allocation2 + $0x168] sm:$0xff]
    %v75 = vld [vmem:[#allocation2 + $0x170] sm:$0xff]
    %v76 = vld [vmem:[#allocation2 + $0x178] sm:$0xff]
    %v77 = vld [vmem:[#allocation2 + $0x180] sm:$0xff]
    %v78 = vld [vmem:[#allocation2 + $0x188] sm:$0xff]
    %v79 = vld [vmem:[#allocation2 + $0x190] sm:$0xff]
    %v80 = vlaneseq
    %v81 = vshrl.u32 %v80, 7
    %v82 = vsub.s32 0, %v81
    %v83 = vrot.slane %v79, %v82
    %vm84 = vcmask 130048
    %v86 = vsel %vm84, %v25, 0
    %v89 = vsel %vm84, %v26, 0
    %v92 = vsel %vm84, %v27, 0
    %v95 = vsel %vm84, %v28, 0
    %97 = vmatprep.subr.mxu0 0.0
    %98 = vmatpush1.msra.mxu0 0.0
    %99 = vmatprep.subr.mxu0 0.0
    %100 = vmatpush1.msra.mxu0 0.0
    %101 = vmatprep.subr.mxu0 0.0
    %102 = vmatpush1.msra.mxu0 0.0
    %103 = vmatprep.subr.mxu0 0.0
    %104 = vmatpush1.msra.mxu0 0.0
    %105 = vmatprep.subr.mxu0 0.0
    %106 = vmatpush1.msra.mxu0 0.0
    %107 = vmatprep.subr.mxu0 0.0
    %108 = vmatpush1.msra.mxu0 0.0
    %109 = vmatprep.subr.mxu0 0.0
    %110 = vmatpush1.msra.mxu0 0.0
    %111 = vmatprep.subr.mxu0 0.0
    %112 = vmatpush1.msra.mxu0 0.0
    %113 = vmatprep.subr.mxu0 0.0
    %114 = vmatpush1.msra.mxu0 0.0
    %115 = vmatprep.subr.mxu0 0.0
    %116 = vmatpush1.msra.mxu0 0.0
    %117 = vmatprep.subr.mxu0 0.0
    %118 = vmatpush1.msra.mxu0 0.0
    %119 = vmatprep.subr.mxu0 0.0
    %120 = vmatpush1.msra.mxu0 0.0
    %121 = vmatprep.subr.mxu0 0.0
    %122 = vmatpush1.msra.mxu0 0.0
    %123 = vmatprep.subr.mxu0 0.0
    %124 = vmatpush1.msra.mxu0 0.0
    %125 = vmatprep.subr.mxu0 0.0
    %126 = vmatpush1.msra.mxu0 %v30
    %127 = vmatprep.subr.mxu0 0.0
    %128 = vmatpush1.msra.mxu0 %v29
    %129 = vmatprep.subr.mxu0 0.0
    %130 = vmatpush2.msra.mxu0 0.0
    %131 = vmatprep.subr.mxu0 0.0
    %132 = vmatpush2.msra.mxu0 0.0
    %133 = vmatprep.subr.mxu0 0.0
    %134 = vmatpush2.msra.mxu0 0.0
    %135 = vmatprep.subr.mxu0 0.0
    %136 = vmatpush2.msra.mxu0 0.0
    %137 = vmatprep.subr.mxu0 0.0
    %138 = vmatpush2.msra.mxu0 0.0
    %139 = vmatprep.subr.mxu0 0.0
    %140 = vmatpush2.msra.mxu0 0.0
    %141 = vmatprep.subr.mxu0 0.0
    %142 = vmatpush2.msra.mxu0 0.0
    %143 = vmatprep.subr.mxu0 0.0
    %144 = vmatpush2.msra.mxu0 0.0
    %145 = vmatprep.subr.mxu0 0.0
    %146 = vmatpush2.msra.mxu0 0.0
    %147 = vmatprep.subr.mxu0 0.0
    %148 = vmatpush2.msra.mxu0 0.0
    %149 = vmatprep.subr.mxu0 0.0
    %150 = vmatpush2.msra.mxu0 0.0
    %151 = vmatprep.subr.mxu0 0.0
    %152 = vmatpush2.msra.mxu0 0.0
    %153 = vmatprep.subr.mxu0 0.0
    %154 = vmatpush2.msra.mxu0 0.0
    %155 = vmatprep.subr.mxu0 0.0
    %156 = vmatpush2.msra.mxu0 0.0
    %157 = vmatprep.subr.mxu0 0.0
    %158 = vmatpush2.msra.mxu0 0.0
    %159 = vmatprep.subr.mxu0 0.0
    %160 = vmatpush2.msra.mxu0 0.0
    %161 = vmatprep.mubr.f32.mxu0 0.0
    %162 = vmatmul.mubr.f32.gmra.mxu0 %v86
    %v163 = vpop.f32.mrf.mxu0
    %v164 = vadd.f32 %v83, %v163
    %v165 = vpop.f32.mrf.mxu0
    %166 = vmatprep.mubr.f32.mxu0 0.0
    %167 = vmatmul.mubr.f32.gmra.mxu0 %v89
    %v168 = vpop.f32.mrf.mxu0
    %v169 = vadd.f32 %v83, %v168
    %v170 = vpop.f32.mrf.mxu0
    %171 = vmatprep.mubr.f32.mxu0 0.0
    %172 = vmatmul.mubr.f32.gmra.mxu0 %v92
    %v173 = vpop.f32.mrf.mxu0
    %v174 = vadd.f32 %v83, %v173
    %v175 = vpop.f32.mrf.mxu0
    %176 = vmatprep.mubr.f32.mxu0 0.0
    %177 = vmatmul.mubr.f32.gmra.mxu0 %v95
    %v178 = vpop.f32.mrf.mxu0
    %v179 = vadd.f32 %v83, %v178
    %v180 = vpop.f32.mrf.mxu0
    %181 = vdwg.mxu0
    %v182 = vtanh.pop %v164
    %v183 = vtanh.pop %v169
    %v184 = vtanh.pop %v174
    %v185 = vtanh.pop %v179
    %v186 = vlaneseq
    %v187 = vshrl.u32 %v186, 7
    %v188 = vsub.s32 1, %v187
    %v189 = vrot.slane %v79, %v188
    %190 = vmatprep.subr.mxu0 0.0
    %191 = vmatpush1.msra.mxu0 %v46
    %192 = vmatprep.subr.mxu0 0.0
    %193 = vmatpush1.msra.mxu0 %v45
    %194 = vmatprep.subr.mxu0 0.0
    %195 = vmatpush1.msra.mxu0 %v44
    %196 = vmatprep.subr.mxu0 0.0
    %197 = vmatpush1.msra.mxu0 %v43
    %198 = vmatprep.subr.mxu0 0.0
    %199 = vmatpush1.msra.mxu0 %v42
    %200 = vmatprep.subr.mxu0 0.0
    %201 = vmatpush1.msra.mxu0 %v41
    %202 = vmatprep.subr.mxu0 0.0
    %203 = vmatpush1.msra.mxu0 %v40
    %204 = vmatprep.subr.mxu0 0.0
    %205 = vmatpush1.msra.mxu0 %v39
    %206 = vmatprep.subr.mxu0 0.0
    %207 = vmatpush1.msra.mxu0 %v38
    %208 = vmatprep.subr.mxu0 0.0
    %209 = vmatpush1.msra.mxu0 %v37
    %210 = vmatprep.subr.mxu0 0.0
    %211 = vmatpush1.msra.mxu0 %v36
    %212 = vmatprep.subr.mxu0 0.0
    %213 = vmatpush1.msra.mxu0 %v35
    %214 = vmatprep.subr.mxu0 0.0
    %215 = vmatpush1.msra.mxu0 %v34
    %216 = vmatprep.subr.mxu0 0.0
    %217 = vmatpush1.msra.mxu0 %v33
    %218 = vmatprep.subr.mxu0 0.0
    %219 = vmatpush1.msra.mxu0 %v32
    %220 = vmatprep.subr.mxu0 0.0
    %221 = vmatpush1.msra.mxu0 %v31
    %222 = vmatprep.subr.mxu0 0.0
    %223 = vmatpush2.msra.mxu0 0.0
    %224 = vmatprep.subr.mxu0 0.0
    %225 = vmatpush2.msra.mxu0 0.0
    %226 = vmatprep.subr.mxu0 0.0
    %227 = vmatpush2.msra.mxu0 0.0
    %228 = vmatprep.subr.mxu0 0.0
    %229 = vmatpush2.msra.mxu0 0.0
    %230 = vmatprep.subr.mxu0 0.0
    %231 = vmatpush2.msra.mxu0 0.0
    %232 = vmatprep.subr.mxu0 0.0
    %233 = vmatpush2.msra.mxu0 0.0
    %234 = vmatprep.subr.mxu0 0.0
    %235 = vmatpush2.msra.mxu0 0.0
    %236 = vmatprep.subr.mxu0 0.0
    %237 = vmatpush2.msra.mxu0 0.0
    %238 = vmatprep.subr.mxu0 0.0
    %239 = vmatpush2.msra.mxu0 0.0
    %240 = vmatprep.subr.mxu0 0.0
    %241 = vmatpush2.msra.mxu0 0.0
    %242 = vmatprep.subr.mxu0 0.0
    %243 = vmatpush2.msra.mxu0 0.0
    %244 = vmatprep.subr.mxu0 0.0
    %245 = vmatpush2.msra.mxu0 0.0
    %246 = vmatprep.subr.mxu0 0.0
    %247 = vmatpush2.msra.mxu0 0.0
    %248 = vmatprep.subr.mxu0 0.0
    %249 = vmatpush2.msra.mxu0 0.0
    %250 = vmatprep.subr.mxu0 0.0
    %251 = vmatpush2.msra.mxu0 0.0
    %252 = vmatprep.subr.mxu0 0.0
    %253 = vmatpush2.msra.mxu0 0.0
    %254 = vmatprep.mubr.f32.mxu0 0.0
    %255 = vmatmul.mubr.f32.gmra.mxu0 %v182
    %v256 = vpop.f32.mrf.mxu0
    %v257 = vadd.f32 %v189, %v256
    %v258 = vpop.f32.mrf.mxu0
    %259 = vmatprep.mubr.f32.mxu0 0.0
    %260 = vmatmul.mubr.f32.gmra.mxu0 %v183
    %v261 = vpop.f32.mrf.mxu0
    %v262 = vadd.f32 %v189, %v261
    %v263 = vpop.f32.mrf.mxu0
    %264 = vmatprep.mubr.f32.mxu0 0.0
    %265 = vmatmul.mubr.f32.gmra.mxu0 %v184
    %v266 = vpop.f32.mrf.mxu0
    %v267 = vadd.f32 %v189, %v266
    %v268 = vpop.f32.mrf.mxu0
    %269 = vmatprep.mubr.f32.mxu0 0.0
    %270 = vmatmul.mubr.f32.gmra.mxu0 %v185
    %v271 = vpop.f32.mrf.mxu0
    %v272 = vadd.f32 %v189, %v271
    %v273 = vpop.f32.mrf.mxu0
    %274 = vdwg.mxu0
    %v275 = vtanh.pop %v257
    %v276 = vtanh.pop %v262
    %v277 = vtanh.pop %v267
    %v278 = vtanh.pop %v272
    %v279 = vlaneseq
    %v280 = vshrl.u32 %v279, 7
    %v281 = vsub.s32 2, %v280
    %v282 = vrot.slane %v79, %v281
    %283 = vmatprep.subr.mxu0 0.0
    %284 = vmatpush1.msra.mxu0 %v62
    %285 = vmatprep.subr.mxu0 0.0
    %286 = vmatpush1.msra.mxu0 %v61
    %287 = vmatprep.subr.mxu0 0.0
    %288 = vmatpush1.msra.mxu0 %v60
    %289 = vmatprep.subr.mxu0 0.0
    %290 = vmatpush1.msra.mxu0 %v59
    %291 = vmatprep.subr.mxu0 0.0
    %292 = vmatpush1.msra.mxu0 %v58
    %293 = vmatprep.subr.mxu0 0.0
    %294 = vmatpush1.msra.mxu0 %v57
    %295 = vmatprep.subr.mxu0 0.0
    %296 = vmatpush1.msra.mxu0 %v56
    %297 = vmatprep.subr.mxu0 0.0
    %298 = vmatpush1.msra.mxu0 %v55
    %299 = vmatprep.subr.mxu0 0.0
    %300 = vmatpush1.msra.mxu0 %v54
    %301 = vmatprep.subr.mxu0 0.0
    %302 = vmatpush1.msra.mxu0 %v53
    %303 = vmatprep.subr.mxu0 0.0
    %304 = vmatpush1.msra.mxu0 %v52
    %305 = vmatprep.subr.mxu0 0.0
    %306 = vmatpush1.msra.mxu0 %v51
    %307 = vmatprep.subr.mxu0 0.0
    %308 = vmatpush1.msra.mxu0 %v50
    %309 = vmatprep.subr.mxu0 0.0
    %310 = vmatpush1.msra.mxu0 %v49
    %311 = vmatprep.subr.mxu0 0.0
    %312 = vmatpush1.msra.mxu0 %v48
    %313 = vmatprep.subr.mxu0 0.0
    %314 = vmatpush1.msra.mxu0 %v47
    %315 = vmatprep.subr.mxu0 0.0
    %316 = vmatpush2.msra.mxu0 0.0
    %317 = vmatprep.subr.mxu0 0.0
    %318 = vmatpush2.msra.mxu0 0.0
    %319 = vmatprep.subr.mxu0 0.0
    %320 = vmatpush2.msra.mxu0 0.0
    %321 = vmatprep.subr.mxu0 0.0
    %322 = vmatpush2.msra.mxu0 0.0
    %323 = vmatprep.subr.mxu0 0.0
    %324 = vmatpush2.msra.mxu0 0.0
    %325 = vmatprep.subr.mxu0 0.0
    %326 = vmatpush2.msra.mxu0 0.0
    %327 = vmatprep.subr.mxu0 0.0
    %328 = vmatpush2.msra.mxu0 0.0
    %329 = vmatprep.subr.mxu0 0.0
    %330 = vmatpush2.msra.mxu0 0.0
    %331 = vmatprep.subr.mxu0 0.0
    %332 = vmatpush2.msra.mxu0 0.0
    %333 = vmatprep.subr.mxu0 0.0
    %334 = vmatpush2.msra.mxu0 0.0
    %335 = vmatprep.subr.mxu0 0.0
    %336 = vmatpush2.msra.mxu0 0.0
    %337 = vmatprep.subr.mxu0 0.0
    %338 = vmatpush2.msra.mxu0 0.0
    %339 = vmatprep.subr.mxu0 0.0
    %340 = vmatpush2.msra.mxu0 0.0
    %341 = vmatprep.subr.mxu0 0.0
    %342 = vmatpush2.msra.mxu0 0.0
    %343 = vmatprep.subr.mxu0 0.0
    %344 = vmatpush2.msra.mxu0 0.0
    %345 = vmatprep.subr.mxu0 0.0
    %346 = vmatpush2.msra.mxu0 0.0
    %347 = vmatprep.mubr.f32.mxu0 0.0
    %348 = vmatmul.mubr.f32.gmra.mxu0 %v275
    %v349 = vpop.f32.mrf.mxu0
    %v350 = vadd.f32 %v282, %v349
    %v351 = vpop.f32.mrf.mxu0
    %352 = vmatprep.mubr.f32.mxu0 0.0
    %353 = vmatmul.mubr.f32.gmra.mxu0 %v276
    %v354 = vpop.f32.mrf.mxu0
    %v355 = vadd.f32 %v282, %v354
    %v356 = vpop.f32.mrf.mxu0
    %357 = vmatprep.mubr.f32.mxu0 0.0
    %358 = vmatmul.mubr.f32.gmra.mxu0 %v277
    %v359 = vpop.f32.mrf.mxu0
    %v360 = vadd.f32 %v282, %v359
    %v361 = vpop.f32.mrf.mxu0
    %362 = vmatprep.mubr.f32.mxu0 0.0
    %363 = vmatmul.mubr.f32.gmra.mxu0 %v278
    %v364 = vpop.f32.mrf.mxu0
    %v365 = vadd.f32 %v282, %v364
    %v366 = vpop.f32.mrf.mxu0
    %367 = vdwg.mxu0
    %v368 = vtanh.pop %v350
    %v369 = vtanh.pop %v355
    %v370 = vtanh.pop %v360
    %v371 = vtanh.pop %v365
    %v372 = vlaneseq
    %v373 = vshrl.u32 %v372, 7
    %v374 = vsub.s32 3, %v373
    %v375 = vrot.slane %v79, %v374
    %376 = vmatprep.subr.mxu0 0.0
    %377 = vmatpush1.msra.mxu0 %v78
    %378 = vmatprep.subr.mxu0 0.0
    %379 = vmatpush1.msra.mxu0 %v77
    %380 = vmatprep.subr.mxu0 0.0
    %381 = vmatpush1.msra.mxu0 %v76
    %382 = vmatprep.subr.mxu0 0.0
    %383 = vmatpush1.msra.mxu0 %v75
    %384 = vmatprep.subr.mxu0 0.0
    %385 = vmatpush1.msra.mxu0 %v74
    %386 = vmatprep.subr.mxu0 0.0
    %387 = vmatpush1.msra.mxu0 %v73
    %388 = vmatprep.subr.mxu0 0.0
    %389 = vmatpush1.msra.mxu0 %v72
    %390 = vmatprep.subr.mxu0 0.0
    %391 = vmatpush1.msra.mxu0 %v71
    %392 = vmatprep.subr.mxu0 0.0
    %393 = vmatpush1.msra.mxu0 %v70
    %394 = vmatprep.subr.mxu0 0.0
    %395 = vmatpush1.msra.mxu0 %v69
    %396 = vmatprep.subr.mxu0 0.0
    %397 = vmatpush1.msra.mxu0 %v68
    %398 = vmatprep.subr.mxu0 0.0
    %399 = vmatpush1.msra.mxu0 %v67
    %400 = vmatprep.subr.mxu0 0.0
    %401 = vmatpush1.msra.mxu0 %v66
    %402 = vmatprep.subr.mxu0 0.0
    %403 = vmatpush1.msra.mxu0 %v65
    %404 = vmatprep.subr.mxu0 0.0
    %405 = vmatpush1.msra.mxu0 %v64
    %406 = vmatprep.subr.mxu0 0.0
    %407 = vmatpush1.msra.mxu0 %v63
    %408 = vmatprep.subr.mxu0 0.0
    %409 = vmatpush2.msra.mxu0 0.0
    %410 = vmatprep.subr.mxu0 0.0
    %411 = vmatpush2.msra.mxu0 0.0
    %412 = vmatprep.subr.mxu0 0.0
    %413 = vmatpush2.msra.mxu0 0.0
    %414 = vmatprep.subr.mxu0 0.0
    %415 = vmatpush2.msra.mxu0 0.0
    %416 = vmatprep.subr.mxu0 0.0
    %417 = vmatpush2.msra.mxu0 0.0
    %418 = vmatprep.subr.mxu0 0.0
    %419 = vmatpush2.msra.mxu0 0.0
    %420 = vmatprep.subr.mxu0 0.0
    %421 = vmatpush2.msra.mxu0 0.0
    %422 = vmatprep.subr.mxu0 0.0
    %423 = vmatpush2.msra.mxu0 0.0
    %424 = vmatprep.subr.mxu0 0.0
    %425 = vmatpush2.msra.mxu0 0.0
    %426 = vmatprep.subr.mxu0 0.0
    %427 = vmatpush2.msra.mxu0 0.0
    %428 = vmatprep.subr.mxu0 0.0
    %429 = vmatpush2.msra.mxu0 0.0
    %430 = vmatprep.subr.mxu0 0.0
    %431 = vmatpush2.msra.mxu0 0.0
    %432 = vmatprep.subr.mxu0 0.0
    %433 = vmatpush2.msra.mxu0 0.0
    %434 = vmatprep.subr.mxu0 0.0
    %435 = vmatpush2.msra.mxu0 0.0
    %436 = vmatprep.subr.mxu0 0.0
    %437 = vmatpush2.msra.mxu0 0.0
    %438 = vmatprep.subr.mxu0 0.0
    %439 = vmatpush2.msra.mxu0 0.0
    %440 = vmatprep.mubr.f32.mxu0 0.0
    %441 = vmatmul.mubr.f32.gmra.mxu0 %v368
    %v442 = vpop.f32.mrf.mxu0
    %v443 = vadd.f32 %v375, %v442
    %v444 = vpop.f32.mrf.mxu0
    %445 = vmatprep.mubr.f32.mxu0 0.0
    %446 = vmatmul.mubr.f32.gmra.mxu0 %v369
    %v447 = vpop.f32.mrf.mxu0
    %v448 = vadd.f32 %v375, %v447
    %v449 = vpop.f32.mrf.mxu0
    %450 = vmatprep.mubr.f32.mxu0 0.0
    %451 = vmatmul.mubr.f32.gmra.mxu0 %v370
    %v452 = vpop.f32.mrf.mxu0
    %v453 = vadd.f32 %v375, %v452
    %v454 = vpop.f32.mrf.mxu0
    %455 = vmatprep.mubr.f32.mxu0 0.0
    %456 = vmatmul.mubr.f32.gmra.mxu0 %v371
    %v457 = vpop.f32.mrf.mxu0
    %v458 = vadd.f32 %v375, %v457
    %v459 = vpop.f32.mrf.mxu0
    %460 = vdwg.mxu0
    %vm461 = vcmask 31744
    %462 = vst.msk [vmem:[%s2] sm:$0xff] %vm461, %v443
    %463 = vst.msk [vmem:[%s2 + $0x8] sm:$0xff] %vm461, %v448
    %464 = vst.msk [vmem:[%s2 + $0x10] sm:$0xff] %vm461, %v453
    %465 = vst.msk [vmem:[%s2 + $0x18] sm:$0xff] %vm461, %v458
    // Predicated region
    $region14: #{_policy_apply.1} parent=1 // pred_check
      _
    $region15: #{_policy_apply.1} parent=1 // pred_check_branch
      %467 = sbr.rel (0) target = $region17
    $region16: #{_policy_apply.1} parent=1 // pred_region
      _
    $region17: #{_policy_apply.1} parent=1 // pred_fallthru
      _
    // Predicated region
    $region18: #{_policy_apply.1} parent=1 // pred_check
      _
    $region19: #{_policy_apply.1} parent=1 // pred_check_branch
      %469 = sbr.rel (0) target = $region21
    $region20: #{_policy_apply.1} parent=1 // pred_region
      _
    $region21: #{_policy_apply.1} parent=1 // pred_fallthru
      _
    %470 = vsyncpa [#allocation3], 1

</llo_original>
